<compile_context>
chip_gen: v7x
topology: tpu7x:2x2x1
jax: 0.10.0
libtpu: 0.0.40
codegen_flags: <defaults>
</compile_context>

<pallas_src>
import functools

import jax
import jax.numpy as jnp
from jax.experimental import pallas as pl
from jax.experimental.pallas import tpu as pltpu

_LANE = 128            # lane width of a vreg
_SUBLANES = 8          # f32 sublanes of a vreg
_MAX_BLOCK_ROWS = 2048  # 2048 x 128 x 4 B = 1 MiB per array per block


def _round_up(x, m):
    return ((x + m - 1) // m) * m


def _log_sigmoid(x):
    # Numerically stable log(sigmoid(x)) = min(x, 0) - log1p(exp(-|x|))
    return jnp.minimum(x, 0.0) - jnp.log1p(jnp.exp(-jnp.abs(x)))


def _simpo_kernel(beta, gamma, label_smoothing,
                  chosen_ref, rejected_ref,
                  losses_ref, chosen_rw_ref, rejected_rw_ref):
    # Always compute in f32 (v5e has no bf16 VPU/EUP path).
    # TODO(synk): on v6e/v7x a bf16 EUP path for bf16 inputs would halve
    # transcendental pushes; keep f32 until loss precision is validated.
    chosen = chosen_ref[...].astype(jnp.float32)
    rejected = rejected_ref[...].astype(jnp.float32)

    logits = chosen - rejected - (gamma / beta)
    bl = beta * logits

    ls_pos = _log_sigmoid(bl)                # single EUP-heavy evaluation
    if label_smoothing != 0.0:
        # log_sigmoid(-x) = log_sigmoid(x) - x  (no second exp/log1p)
        ls_neg = ls_pos - bl
        losses = (-ls_pos * (1.0 - label_smoothing)
                  - ls_neg * label_smoothing)
    else:
        # Trace-time branch: label_smoothing == 0 emits no smoothing term.
        losses = -ls_pos

    losses_ref[...] = losses.astype(losses_ref.dtype)
    chosen_rw_ref[...] = (beta * chosen).astype(chosen_rw_ref.dtype)
    rejected_rw_ref[...] = (beta * rejected).astype(rejected_rw_ref.dtype)


@functools.partial(jax.jit,
                   static_argnames=("beta", "gamma", "label_smoothing"))
def _simpo_loss_impl(policy_chosen_logps, policy_rejected_logps,
                     beta, gamma, label_smoothing):
    (b,) = policy_chosen_logps.shape
    dtype = policy_chosen_logps.dtype

    # ---- lane/sublane-dense padded layout ----------------------------------
    rows = max(_SUBLANES, pl.cdiv(b, _LANE))
    rows = _round_up(rows, _SUBLANES)
    if rows > _MAX_BLOCK_ROWS:
        # Near-even block sizing: padding overhead capped at < 8 rows.
        num_blocks = pl.cdiv(rows, _MAX_BLOCK_ROWS)
        block_rows = _round_up(pl.cdiv(rows, num_blocks), _SUBLANES)
        rows = num_blocks * block_rows
    else:
        block_rows = rows
        num_blocks = 1
    b_pad = rows * _LANE

    def _to_tile(x):
        if b_pad != b:
            x = jnp.pad(x, (0, b_pad - b))
        return x.reshape(rows, _LANE)

    chosen_2d = _to_tile(policy_chosen_logps)
    rejected_2d = _to_tile(policy_rejected_logps)

    # Hyperparameters are trace-time constants (one compile per triple).
    kernel = functools.partial(
        _simpo_kernel, float(beta), float(gamma), float(label_smoothing))

    spec = pl.BlockSpec((block_rows, _LANE), lambda i: (i, 0))
    out_shape = tuple(
        jax.ShapeDtypeStruct((rows, _LANE), dtype) for _ in range(3))

    elem_bytes = jnp.dtype(dtype).itemsize
    cost = pl.CostEstimate(
        flops=8 * b_pad,
        transcendentals=2 * b_pad,
        bytes_accessed=5 * b_pad * elem_bytes)

    losses, chosen_rw, rejected_rw = pl.pallas_call(
        kernel,
        out_shape=out_shape,
        grid=(num_blocks,),
        in_specs=[spec, spec],
        out_specs=(spec, spec, spec),
        # The padded slabs are fresh temporaries; alias them to the reward
        # outputs (same shape/dtype) to save two HBM output allocations.
        input_output_aliases={0: 1, 1: 2},
        compiler_params=pltpu.CompilerParams(
            # TODO(synk): on v7x verify "parallel" shards row blocks across
            # both TensorCores; if not, switch to pltpu.CORE_PARALLEL.
            dimension_semantics=("parallel",)),
        cost_estimate=cost,
    )(chosen_2d, rejected_2d)

    return (losses.reshape(b_pad)[:b],
            chosen_rw.reshape(b_pad)[:b],
            rejected_rw.reshape(b_pad)[:b])


def simpo_loss(policy_chosen_logps, policy_rejected_logps,
               beta=2.0, gamma=0.5, label_smoothing=0.0):
    """SimPO loss. Returns (losses, chosen_rewards, rejected_rewards), each [b]."""
    assert policy_chosen_logps.shape == policy_rejected_logps.shape
    assert policy_chosen_logps.ndim == 1
    # Hyperparameters must be Python scalars (trace-time constants).
    beta = float(beta)
    gamma = float(gamma)
    label_smoothing = float(label_smoothing)
    return _simpo_loss_impl(policy_chosen_logps, policy_rejected_logps,
                            beta=beta, gamma=gamma,
                            label_smoothing=label_smoothing)


def _simpo_loss_ref(chosen, rejected, beta=2.0, gamma=0.5, label_smoothing=0.0):
    pi_logratios = chosen - rejected
    logits = pi_logratios - gamma / beta
    ls = jax.nn.log_sigmoid
    losses = (-ls(beta * logits) * (1.0 - label_smoothing)
              - ls(-beta * logits) * label_smoothing)
    return losses, beta * chosen, beta * rejected


if __name__ == "__main__":
    key = jax.random.PRNGKey(0)
    ok = True
    for b in (8, 200):   # cover both exact-fit and padded/sliced paths
        k1, k2 = jax.random.split(jax.random.fold_in(key, b))
        # Average log-probabilities are negative; scale to a realistic range.
        policy_chosen_logps = -jnp.abs(jax.random.normal(k1, (b,), jnp.float32))
        policy_rejected_logps = -jnp.abs(jax.random.normal(k2, (b,), jnp.float32))

        for ls_val in (0.0, 0.1):
            losses, chosen_rw, rejected_rw = simpo_loss(
                policy_chosen_logps, policy_rejected_logps,
                beta=2.0, gamma=0.5, label_smoothing=ls_val)
            jax.block_until_ready((losses, chosen_rw, rejected_rw))

            ref_losses, ref_cr, ref_rr = _simpo_loss_ref(
                policy_chosen_logps, policy_rejected_logps,
                beta=2.0, gamma=0.5, label_smoothing=ls_val)

            ok &= bool(jnp.allclose(losses, ref_losses, atol=1e-5))
            ok &= bool(jnp.allclose(chosen_rw, ref_cr, atol=1e-5))
            ok &= bool(jnp.allclose(rejected_rw, ref_rr, atol=1e-5))

    assert ok, "mismatch vs reference"
    print("KERNEL_OK")
</pallas_src>

<mosaic_0001>
module attributes {stable_mosaic.version = 11 : i64} {
  func.func @_simpo_kernel(%arg0: i32, %arg1: memref<8x128xf32, #tpu.memory_space<vmem>>, %arg2: memref<8x128xf32, #tpu.memory_space<vmem>>, %arg3: memref<8x128xf32, #tpu.memory_space<vmem>>, %arg4: memref<8x128xf32, #tpu.memory_space<vmem>>, %arg5: memref<8x128xf32, #tpu.memory_space<vmem>>) attributes {dimension_semantics = [#tpu.dimension_semantics<parallel>], iteration_bounds = array<i64: 1>, scalar_prefetch = 0 : i64, scratch_operands = 0 : i64, tpu.core_type = #tpu.core_type<tc>, window_params = [{transform_indices = @transform_0, window_bounds = array<i64: 8, 128>}, {transform_indices = @transform_1, window_bounds = array<i64: 8, 128>}, {transform_indices = @transform_2, window_bounds = array<i64: 8, 128>}, {transform_indices = @transform_3, window_bounds = array<i64: 8, 128>}, {transform_indices = @transform_4, window_bounds = array<i64: 8, 128>}]} {
    %c0 = arith.constant 0 : index
    %c0_0 = arith.constant 0 : index
    %0 = vector.load %arg1[%c0, %c0_0] : memref<8x128xf32, #tpu.memory_space<vmem>>, vector<8x128xf32>
    %c0_1 = arith.constant 0 : index
    %c0_2 = arith.constant 0 : index
    %1 = vector.load %arg2[%c0_1, %c0_2] : memref<8x128xf32, #tpu.memory_space<vmem>>, vector<8x128xf32>
    %2 = arith.subf %0, %1 : vector<8x128xf32>
    %cst = arith.constant 2.500000e-01 : f32
    %3 = vector.broadcast %cst : f32 to vector<8x128xf32>
    %4 = arith.subf %2, %3 : vector<8x128xf32>
    %cst_3 = arith.constant 2.000000e+00 : f32
    %5 = vector.broadcast %cst_3 : f32 to vector<8x128xf32>
    %6 = arith.mulf %5, %4 : vector<8x128xf32>
    %cst_4 = arith.constant 0.000000e+00 : f32
    %7 = vector.broadcast %cst_4 : f32 to vector<8x128xf32>
    %8 = arith.minimumf %6, %7 : vector<8x128xf32>
    %9 = math.absf %6 : vector<8x128xf32>
    %cst_5 = arith.constant 0.000000e+00 : f32
    %10 = vector.broadcast %cst_5 : f32 to vector<8x128xf32>
    %11 = arith.subf %10, %9 : vector<8x128xf32>
    %12 = math.exp %11 : vector<8x128xf32>
    %13 = math.log1p %12 : vector<8x128xf32>
    %14 = arith.subf %8, %13 : vector<8x128xf32>
    %cst_6 = arith.constant 0.000000e+00 : f32
    %15 = vector.broadcast %cst_6 : f32 to vector<8x128xf32>
    %16 = arith.subf %15, %14 : vector<8x128xf32>
    %c0_7 = arith.constant 0 : index
    %c0_8 = arith.constant 0 : index
    %17 = vector.load %arg3[%c0_7, %c0_8] : memref<8x128xf32, #tpu.memory_space<vmem>>, vector<8x128xf32>
    tpu.vector_store %arg3[%c0_7, %c0_8], %16 {strides = array<i32>} : memref<8x128xf32, #tpu.memory_space<vmem>>, vector<8x128xf32>,
    %cst_9 = arith.constant 2.000000e+00 : f32
    %18 = vector.broadcast %cst_9 : f32 to vector<8x128xf32>
    %19 = arith.mulf %18, %0 : vector<8x128xf32>
    %c0_10 = arith.constant 0 : index
    %c0_11 = arith.constant 0 : index
    %20 = vector.load %arg4[%c0_10, %c0_11] : memref<8x128xf32, #tpu.memory_space<vmem>>, vector<8x128xf32>
    tpu.vector_store %arg4[%c0_10, %c0_11], %19 {strides = array<i32>} : memref<8x128xf32, #tpu.memory_space<vmem>>, vector<8x128xf32>,
    %cst_12 = arith.constant 2.000000e+00 : f32
    %21 = vector.broadcast %cst_12 : f32 to vector<8x128xf32>
    %22 = arith.mulf %21, %1 : vector<8x128xf32>
    %c0_13 = arith.constant 0 : index
    %c0_14 = arith.constant 0 : index
    %23 = vector.load %arg5[%c0_13, %c0_14] : memref<8x128xf32, #tpu.memory_space<vmem>>, vector<8x128xf32>
    tpu.vector_store %arg5[%c0_13, %c0_14], %22 {strides = array<i32>} : memref<8x128xf32, #tpu.memory_space<vmem>>, vector<8x128xf32>,
    return
  }
  func.func @transform_0(%arg0: i32) -> (i32, i32) {
    %c0_i32 = arith.constant 0 : i32
    %c0_i32_0 = arith.constant 0 : i32
    return %arg0, %c0_i32 : i32, i32
  }
  func.func @transform_1(%arg0: i32) -> (i32, i32) {
    %c0_i32 = arith.constant 0 : i32
    %c0_i32_0 = arith.constant 0 : i32
    return %arg0, %c0_i32 : i32, i32
  }
  func.func @transform_2(%arg0: i32) -> (i32, i32) {
    %c0_i32 = arith.constant 0 : i32
    %c0_i32_0 = arith.constant 0 : i32
    return %arg0, %c0_i32 : i32, i32
  }
  func.func @transform_3(%arg0: i32) -> (i32, i32) {
    %c0_i32 = arith.constant 0 : i32
    %c0_i32_0 = arith.constant 0 : i32
    return %arg0, %c0_i32 : i32, i32
  }
  func.func @transform_4(%arg0: i32) -> (i32, i32) {
    %c0_i32 = arith.constant 0 : i32
    %c0_i32_0 = arith.constant 0 : i32
    return %arg0, %c0_i32 : i32, i32
  }
}

</mosaic_0001>

<llo_original>
// kernel: _simpo_loss_impl.1
$region0: #{_simpo_loss_impl.1}
  #allocation0 [shape = 'u32[]', space=smem, size = 0x4, offset = 0x4, fixed_abs, tag = 'smem constant byte address 0x4 - core index']
  #allocation1 [shape = 'u32[144,128]{1,0:T(1,128)}', space=vmem, size = 0x12000, scoped, tag = 'internal scratch']
  %s0 = inlined_call_operand.vmem [shape: f32[8,128], index: 0, kind: input, shape index: {}, may-alias: {0,3}]
  %s1 = inlined_call_operand.vmem [shape: f32[8,128], index: 1, kind: input, shape index: {}, may-alias: {1,4}]
  %s2 = inlined_call_operand.vmem [shape: f32[8,128], index: 2, kind: output, shape index: {0}]
  %s3 = inlined_call_operand.vmem [shape: f32[8,128], index: 3, kind: output, shape index: {1}, may-alias: {0,3}]
  %s4 = inlined_call_operand.vmem [shape: f32[8,128], index: 4, kind: output, shape index: {2}, may-alias: {1,4}]
  %5 = xla_tuple %s2, %s3, %s4
  %s6 = sld [smem:[#allocation0]]
  $region34: #{_simpo_loss_impl.1} parent=0
    _
  %s8 = ssub.s32 1, %s6
  %s9 = scalar_select 0, %s8, %s6
  // Predicated region
  $region2: #{_simpo_loss_impl.1} parent=0 // pred_check
    _
  $region3: #{_simpo_loss_impl.1} parent=0 // pred_check_branch
    %11 = sbr.rel (0) target = $region5
  $region4: #{_simpo_loss_impl.1} parent=0 // pred_region
    _
  $region5: #{_simpo_loss_impl.1} parent=0 // pred_fallthru
    _
  // Predicated region
  $region6: #{_simpo_loss_impl.1} parent=0 // pred_check
    _
  $region7: #{_simpo_loss_impl.1} parent=0 // pred_check_branch
    %13 = sbr.rel (0) target = $region9
  $region8: #{_simpo_loss_impl.1} parent=0 // pred_region
    _
  $region9: #{_simpo_loss_impl.1} parent=0 // pred_fallthru
    _
  %v14 = vld [vmem:[%s0] sm:$0xff]
  %v15 = vld [vmem:[%s1] sm:$0xff]
  %v16 = vsub.f32 %v14, %v15
  %v17 = vsub.f32 %v16, 0.25
  %v18 = vmul.f32 %v17, 2.0
  %v19 = vmin.f32 %v18, 0.0
  %v20 = vand.u32 2147483647, %v18
  %v21 = vsub.f32 0.0, %v20
  %v22 = vmul.f32 %v21, 1.442695
  %v23 = vpow.pop %v22
  %v24 = vadd.f32 %v23, 1.0
  %v25 = vlog2.pop %v24
  %v26 = vmul.f32 %v25, 0.6931472
  %v27 = vmul.f32 -0.5, %v23
  %v28 = vadd.f32 %v27, 1.0
  %v29 = vmul.f32 %v28, %v23
  %v30 = vand.u32 2147483647, %v23
  %vm31 = vcmp.lt.f32.partialorder %v30, 0.0004427343
  %v32 = vsel %vm31, %v29, %v26
  %v33 = vsub.f32 %v19, %v32
  %v34 = vsub.f32 0.0, %v33
  %35 = vst [vmem:[%s2] sm:$0xff] %v34
  %v36 = vmul.f32 %v14, 2.0
  %37 = vst [vmem:[%s3] sm:$0xff] %v36
  %v38 = vmul.f32 %v15, 2.0
  %39 = vst [vmem:[%s4] sm:$0xff] %v38
  // Predicated region
  $region10: #{_simpo_loss_impl.1} parent=0 // pred_check
    _
  $region11: #{_simpo_loss_impl.1} parent=0 // pred_check_branch
    %41 = sbr.rel (0) target = $region13
  $region12: #{_simpo_loss_impl.1} parent=0 // pred_region
    _
  $region13: #{_simpo_loss_impl.1} parent=0 // pred_fallthru
    _
  // Predicated region
  $region14: #{_simpo_loss_impl.1} parent=0 // pred_check
    _
  $region15: #{_simpo_loss_impl.1} parent=0 // pred_check_branch
    %43 = sbr.rel (0) target = $region17
  $region16: #{_simpo_loss_impl.1} parent=0 // pred_region
    _
  $region17: #{_simpo_loss_impl.1} parent=0 // pred_fallthru
    _
  // Predicated region
  $region18: #{_simpo_loss_impl.1} parent=0 // pred_check
    _
  $region19: #{_simpo_loss_impl.1} parent=0 // pred_check_branch
    %45 = sbr.rel (0) target = $region21
  $region20: #{_simpo_loss_impl.1} parent=0 // pred_region
    _
  $region21: #{_simpo_loss_impl.1} parent=0 // pred_fallthru
    _
  // Predicated region
  $region22: #{_simpo_loss_impl.1} parent=0 // pred_check
    _
  $region23: #{_simpo_loss_impl.1} parent=0 // pred_check_branch
    %47 = sbr.rel (0) target = $region25
  $region24: #{_simpo_loss_impl.1} parent=0 // pred_region
    _
  $region25: #{_simpo_loss_impl.1} parent=0 // pred_fallthru
    _
  // Predicated region
  $region26: #{_simpo_loss_impl.1} parent=0 // pred_check
    _
  $region27: #{_simpo_loss_impl.1} parent=0 // pred_check_branch
    %49 = sbr.rel (0) target = $region29
  $region28: #{_simpo_loss_impl.1} parent=0 // pred_region
    _
  $region29: #{_simpo_loss_impl.1} parent=0 // pred_fallthru
    _
  // Predicated region
  $region30: #{_simpo_loss_impl.1} parent=0 // pred_check
    _
  $region31: #{_simpo_loss_impl.1} parent=0 // pred_check_branch
    %51 = sbr.rel (0) target = $region33
  $region32: #{_simpo_loss_impl.1} parent=0 // pred_region
    _
  $region33: #{_simpo_loss_impl.1} parent=0 // pred_fallthru
    _

</llo_original>
